<compile_context>
chip_gen: v6e
topology: v6e:2x2x1
jax: 0.10.0
libtpu: 0.0.40
codegen_flags: <defaults>
</compile_context>

<pallas_src>
import functools
import math

import numpy as np
import jax
import jax.numpy as jnp
from jax.experimental import pallas as pl
from jax.experimental.pallas import tpu as pltpu


def _log_sigmoid(x):
    # log(sigmoid(x)) = min(x, 0) - log(1 + exp(-|x|)); stable for large |x|.
    return jnp.minimum(x, 0.0) - jnp.log(1.0 + jnp.exp(-jnp.abs(x)))


def _auto_tile(b):
    for t in (256, 128, 64, 32, 16, 8):
        if b % t == 0:
            return t
    raise ValueError("batch size must be a multiple of 8")


# ----------------------------- Pallas kernels ------------------------------

def _nll_kernel(center_ids, context_ids,           # scalar-prefetch refs (SMEM)
                cemb_hbm, xemb_hbm,                # embedding tables (HBM, ANY)
                loss_ref,                          # (1, 1) f32 output
                u_all, v_bufs, m_scr, l_scr, acc_ref, sems,
                *, batch_size):
    """mean( log(sum(exp(V @ U.T), 1)) - sum(U*V, 1) ) with online LSE.

    grid = (V row tiles, U column tiles). U is resident in VMEM (gathered
    once); V row tiles are double buffered and prefetched one row tile ahead.
    """
    i = pl.program_id(0)             # row tile (context / V rows)
    j = pl.program_id(1)             # column tile (center / U rows) -> LSE axis
    ni = pl.num_programs(0)
    nj = pl.num_programs(1)
    tb = v_bufs.shape[1]
    b_total = u_all.shape[0]
    slot = i % 2

    def start_v_gather(tile, sl):
        base = tile * tb

        @pl.loop(0, tb)
        def _(r):
            idx = context_ids[base + r]
            pltpu.make_async_copy(xemb_hbm.at[pl.ds(idx, 1)],
                                  v_bufs.at[sl, pl.ds(r, 1)],
                                  sems.at[sl]).start()

    # ---- very first step: zero acc, gather resident U, prime V tile 0 ----
    @pl.when(jnp.logical_and(i == 0, j == 0))
    def _():
        acc_ref[...] = jnp.zeros_like(acc_ref)

        @pl.loop(0, b_total)
        def _(r):
            idx = center_ids[r]
            pltpu.make_async_copy(cemb_hbm.at[pl.ds(idx, 1)],
                                  u_all.at[pl.ds(r, 1)], sems.at[2]).start()

        start_v_gather(0, 0)
        # Aggregated wait: one descriptor covering the whole resident-U buffer.
        pltpu.make_async_copy(cemb_hbm.at[pl.ds(0, b_total)], u_all,
                              sems.at[2]).wait()

    # ---- start of a row tile: reset LSE state, wait V, prefetch next V ----
    @pl.when(j == 0)
    def _():
        m_scr[...] = jnp.full_like(m_scr, -jnp.inf)
        l_scr[...] = jnp.zeros_like(l_scr)
        # Aggregated wait for this row tile's V gathers.
        pltpu.make_async_copy(xemb_hbm.at[pl.ds(0, tb)], v_bufs.at[slot],
                              sems.at[slot]).wait()

        @pl.when(i + 1 < ni)
        def _():
            start_v_gather(i + 1, 1 - slot)     # overlap with this row tile

    # ---- compute: online (numerically stable) log-sum-exp ----
    u = u_all[pl.ds(pl.multiple_of(j * tb, tb), tb), :]               # (tb, Dp)
    v = v_bufs[slot]                                                  # (tb, Dp)

    s = jnp.dot(v, u.T, preferred_element_type=jnp.float32)          # (tb, tb)
    m_new = jnp.maximum(m_scr[...], jnp.max(s, axis=1, keepdims=True))
    alpha = jnp.exp(m_scr[...] - m_new)
    l_scr[...] = alpha * l_scr[...] + jnp.sum(jnp.exp(s - m_new), axis=1,
                                              keepdims=True)
    m_scr[...] = m_new

    # ---- diagonal tile: matching-row dots read straight off diag(s) ----
    @pl.when(j == i)
    def _():
        rows = jax.lax.broadcasted_iota(jnp.int32, (tb, tb), 0)
        cols = jax.lax.broadcasted_iota(jnp.int32, (tb, tb), 1)
        diag = jnp.sum(jnp.where(rows == cols, s, 0.0), axis=1, keepdims=True)
        acc_ref[...] = acc_ref[...] - jnp.sum(diag, axis=0, keepdims=True)

    # ---- last column tile: finalize this row tile's LSE (part_b) ----
    @pl.when(j == nj - 1)
    def _():
        lse = m_scr[...] + jnp.log(l_scr[...])                        # (tb, 1)
        acc_ref[...] = acc_ref[...] + jnp.sum(lse, axis=0, keepdims=True)

    # ---- very last step: single store of the mean loss ----
    @pl.when(jnp.logical_and(i == ni - 1, j == nj - 1))
    def _():
        loss_ref[...] = acc_ref[...] / batch_size


def _neg_kernel(center_ids, context_ids, neg_ids,   # scalar-prefetch refs (SMEM)
                cemb_hbm, xemb_hbm,                  # embedding tables (HBM, ANY)
                loss_ref,                            # (1, 1) f32 output
                u_bufs, v_bufs, n_bufs, acc_ref, sems,
                *, batch_size, num_neg):
    """mean( -( log sig(u.v) + sum_k log sig(-neg_k.u) ) ), double buffered."""
    i = pl.program_id(0)
    nb = pl.num_programs(0)
    tb = u_bufs.shape[1]
    k = num_neg
    slot = i % 2

    def start_tile_gathers(tile, sl):
        base = tile * tb

        @pl.loop(0, tb)
        def _(r):
            cidx = center_ids[base + r]
            pltpu.make_async_copy(cemb_hbm.at[pl.ds(cidx, 1)],
                                  u_bufs.at[sl, pl.ds(r, 1)],
                                  sems.at[sl, 0]).start()
            xidx = context_ids[base + r]
            pltpu.make_async_copy(xemb_hbm.at[pl.ds(xidx, 1)],
                                  v_bufs.at[sl, pl.ds(r, 1)],
                                  sems.at[sl, 1]).start()
            # Negatives stored s-major: plane s occupies rows [s*tb, (s+1)*tb).
            for s in range(k):
                nidx = neg_ids[(base + r) * k + s]
                pltpu.make_async_copy(cemb_hbm.at[pl.ds(nidx, 1)],
                                      n_bufs.at[sl, pl.ds(s * tb + r, 1)],
                                      sems.at[sl, 2]).start()

    def wait_tile_gathers(sl):
        # Aggregated waits: one descriptor per buffer (byte count = all rows).
        pltpu.make_async_copy(cemb_hbm.at[pl.ds(0, tb)], u_bufs.at[sl],
                              sems.at[sl, 0]).wait()
        pltpu.make_async_copy(xemb_hbm.at[pl.ds(0, tb)], v_bufs.at[sl],
                              sems.at[sl, 1]).wait()
        pltpu.make_async_copy(cemb_hbm.at[pl.ds(0, tb * k)], n_bufs.at[sl],
                              sems.at[sl, 2]).wait()

    @pl.when(i == 0)
    def _():
        acc_ref[...] = jnp.zeros_like(acc_ref)
        start_tile_gathers(0, 0)                  # prime slot 0

    wait_tile_gathers(slot)

    @pl.when(i + 1 < nb)
    def _():
        start_tile_gathers(i + 1, 1 - slot)       # prefetch next tile

    u = u_bufs[slot]                              # (tb, Dp)
    v = v_bufs[slot]                              # (tb, Dp)

    # positive pairs: log sigmoid(u . v)
    pos = jnp.sum(u * v, axis=1, keepdims=True)                       # (tb, 1)
    tile_sum = jnp.sum(_log_sigmoid(pos), axis=0, keepdims=True)      # (1, 1)

    # negatives: k elementwise multiply-reduce planes (no (tb*k, tb) matmul,
    # no vreg cliff).
    for s in range(k):
        neg_s = n_bufs[slot, pl.ds(s * tb, tb), :]                    # (tb, Dp)
        dots = jnp.sum(neg_s * u, axis=1, keepdims=True)              # (tb, 1)
        tile_sum = tile_sum + jnp.sum(_log_sigmoid(-dots), axis=0,
                                      keepdims=True)

    acc_ref[...] = acc_ref[...] - tile_sum

    @pl.when(i == nb - 1)
    def _():
        loss_ref[...] = acc_ref[...] / batch_size


# ------------------------------- wrappers ----------------------------------

def nll_loss_pallas(center_ids, context_ids, center_tab, context_tab, *,
                    tile_b=None):
    b = int(center_ids.shape[0])
    vocab, dim = center_tab.shape
    if tile_b is None:
        tile_b = _auto_tile(b)
    assert dim % 128 == 0, "embedding dim must be padded to a multiple of 128"
    assert b % tile_b == 0 and tile_b % 8 == 0
    assert vocab >= max(b, tile_b), "vocab must cover the aggregated-wait window"
    nb = b // tile_b

    # resident U + double-buffered V + LSE state + accumulator (bytes)
    scratch_bytes = 4 * (b * dim + 2 * tile_b * dim + 2 * tile_b + 1)
    assert scratch_bytes <= 40 * (1 << 20), "resident-U scratch too large"
    vmem_limit = min(56 * (1 << 20),
                     max(32 * (1 << 20), scratch_bytes + (8 << 20)))

    grid_spec = pltpu.PrefetchScalarGridSpec(
        num_scalar_prefetch=2,
        grid=(nb, nb),
        in_specs=[pl.BlockSpec(memory_space=pl.ANY),      # center table (HBM)
                  pl.BlockSpec(memory_space=pl.ANY)],     # context table (HBM)
        out_specs=pl.BlockSpec((1, 1), lambda *_: (0, 0)),
        scratch_shapes=[
            pltpu.VMEM((b, dim), jnp.float32),            # resident U (all rows)
            pltpu.VMEM((2, tile_b, dim), jnp.float32),    # double-buffered V tiles
            pltpu.VMEM((tile_b, 1), jnp.float32),         # running max
            pltpu.VMEM((tile_b, 1), jnp.float32),         # running sum
            pltpu.VMEM((1, 1), jnp.float32),              # loss accumulator
            pltpu.SemaphoreType.DMA((3,)),                # [V slot0, V slot1, U]
        ],
    )
    out = pl.pallas_call(
        functools.partial(_nll_kernel, batch_size=b),
        out_shape=jax.ShapeDtypeStruct((1, 1), jnp.float32),
        grid_spec=grid_spec,
        compiler_params=pltpu.CompilerParams(
            dimension_semantics=("arbitrary", "arbitrary"),
            vmem_limit_bytes=vmem_limit),
    )(jnp.asarray(center_ids, jnp.int32), jnp.asarray(context_ids, jnp.int32),
      center_tab, context_tab)
    return out[0, 0]


def neg_loss_pallas(center_ids, context_ids, neg_ids_flat, center_tab,
                    context_tab, *, num_neg, tile_b=None):
    b = int(center_ids.shape[0])
    vocab, dim = center_tab.shape
    if tile_b is None:
        tile_b = _auto_tile(b)
    assert dim % 128 == 0, "embedding dim must be padded to a multiple of 128"
    assert b % tile_b == 0 and tile_b % 8 == 0
    assert int(neg_ids_flat.shape[0]) == b * num_neg
    assert vocab >= max(tile_b * num_neg, tile_b)
    nb = b // tile_b

    scratch_bytes = 4 * (2 * tile_b * dim * (2 + num_neg) + 1)
    vmem_limit = min(56 * (1 << 20),
                     max(32 * (1 << 20), scratch_bytes + (8 << 20)))

    grid_spec = pltpu.PrefetchScalarGridSpec(
        num_scalar_prefetch=3,
        grid=(nb,),
        in_specs=[pl.BlockSpec(memory_space=pl.ANY),
                  pl.BlockSpec(memory_space=pl.ANY)],
        out_specs=pl.BlockSpec((1, 1), lambda *_: (0, 0)),
        scratch_shapes=[
            pltpu.VMEM((2, tile_b, dim), jnp.float32),             # U rows (x2)
            pltpu.VMEM((2, tile_b, dim), jnp.float32),             # V rows (x2)
            pltpu.VMEM((2, tile_b * num_neg, dim), jnp.float32),   # negatives, s-major
            pltpu.VMEM((1, 1), jnp.float32),                       # loss accumulator
            pltpu.SemaphoreType.DMA((2, 3)),                       # [slot, {u,v,n}]
        ],
    )
    out = pl.pallas_call(
        functools.partial(_neg_kernel, batch_size=b, num_neg=num_neg),
        out_shape=jax.ShapeDtypeStruct((1, 1), jnp.float32),
        grid_spec=grid_spec,
        compiler_params=pltpu.CompilerParams(
            dimension_semantics=("arbitrary",),
            vmem_limit_bytes=vmem_limit),
    )(jnp.asarray(center_ids, jnp.int32), jnp.asarray(context_ids, jnp.int32),
      jnp.asarray(neg_ids_flat, jnp.int32), center_tab, context_tab)
    return out[0, 0]


# ------------------------------ module port --------------------------------

class WordVecJax:
    """JAX/Pallas port of the PyTorch WordVec module's forward pass."""

    def __init__(self, V, embedding_dim, loss_func, counts, key, tile_b=None):
        k1, k2 = jax.random.split(key)
        std = 1.0 / math.sqrt(embedding_dim)
        ce = jax.random.normal(k1, (V, embedding_dim), jnp.float32) * std
        ce = jnp.clip(ce, -1.0, 1.0)
        cx = jax.random.normal(k2, (V, embedding_dim), jnp.float32) * std
        cx = jnp.clip(cx, -1.0 + 1e-10, 1.0 - 1e-10)
        self.center_embeddings = ce          # logical (V, D) weights
        self.context_embeddings = cx
        # Lane-dense copies for the kernels: pad D up to a multiple of 128 with
        # zeros (zero lanes do not change any dot product or the losses).
        d_pad = (-embedding_dim) % 128
        self._center_padded = jnp.pad(ce, ((0, 0), (0, d_pad)))
        self._context_padded = jnp.pad(cx, ((0, 0), (0, d_pad)))
        self.loss_func = loss_func
        self.counts = np.asarray(counts, dtype=np.float64)
        self.tile_b = tile_b
        self.k = 5
        # Host-side sampling matches the torch module's per-call
        # np.random.choice; deterministic generator for the demo.
        self._rng = np.random.default_rng(0)
        self._last_negatives = None

    def forward(self, center_word, context_word):
        if self.loss_func == 'nll':
            return self.negative_log_likelihood_loss(center_word, context_word)
        elif self.loss_func == 'neg':
            return self.negative_sampling(center_word, context_word)
        else:
            raise Exception('No implementation found for %s' % self.loss_func)

    def negative_log_likelihood_loss(self, center_word, context_word):
        return nll_loss_pallas(center_word, context_word,
                               self._center_padded, self._context_padded,
                               tile_b=self.tile_b)

    def negative_sampling(self, center_word, context_word):
        b = int(center_word.shape[0])
        probs = self.counts / np.sum(self.counts)
        negative_samples = self._rng.choice(
            len(self.counts), size=(b, self.k), replace=False, p=probs)
        self._last_negatives = negative_samples
        neg_flat = jnp.asarray(negative_samples.reshape(-1), jnp.int32)
        return neg_loss_pallas(center_word, context_word, neg_flat,
                               self._center_padded, self._context_padded,
                               num_neg=self.k, tile_b=self.tile_b)


# --------------------------------- main -------------------------------------

if __name__ == "__main__":
    key = jax.random.PRNGKey(0)
    vocab, dim, batch, tile_b = 1024, 96, 128, 32   # dim padded to 128 internally

    counts = np.arange(1, vocab + 1, dtype=np.float64)
    k_params, k_c, k_x = jax.random.split(key, 3)
    center_word = jax.random.randint(k_c, (batch,), 0, vocab, dtype=jnp.int32)
    context_word = jax.random.randint(k_x, (batch,), 0, vocab, dtype=jnp.int32)

    # ---------------- 'nll' loss path ----------------
    model_nll = WordVecJax(vocab, dim, 'nll', counts, k_params, tile_b=tile_b)
    loss_nll = model_nll.forward(center_word, context_word)
    jax.block_until_ready(loss_nll)

    u = model_nll.center_embeddings[center_word]
    vv = model_nll.context_embeddings[context_word]
    ref_nll = jnp.mean(jnp.log(jnp.sum(jnp.exp(vv @ u.T), axis=1))
                       - jnp.sum(u * vv, axis=1))
    assert jnp.allclose(loss_nll, ref_nll, rtol=1e-4, atol=1e-4), (loss_nll, ref_nll)

    # ---------------- 'neg' (negative sampling) loss path ----------------
    model_neg = WordVecJax(vocab, dim, 'neg', counts, k_params, tile_b=tile_b)
    loss_neg = model_neg.forward(center_word, context_word)
    jax.block_until_ready(loss_neg)

    neg_idx = jnp.asarray(model_neg._last_negatives)
    nu = model_neg.center_embeddings[neg_idx]                    # (B, K, D)
    sig = lambda x: 1.0 / (1.0 + jnp.exp(-x))
    pa = jnp.log(sig(jnp.sum(u * vv, axis=1)))
    pb = jnp.sum(jnp.log(sig(-jnp.sum(nu * u[:, None, :], axis=2))), axis=1)
    ref_neg = jnp.mean(-(pa + pb))
    assert jnp.allclose(loss_neg, ref_neg, rtol=1e-4, atol=1e-4), (loss_neg, ref_neg)

    print("KERNEL_OK")
</pallas_src>

<mosaic_0001>
module attributes {stable_mosaic.version = 11 : i64} {
  func.func @_nll_kernel(%arg0: i32, %arg1: i32, %arg2: memref<128xi32, #tpu.memory_space<smem>>, %arg3: memref<128xi32, #tpu.memory_space<smem>>, %arg4: memref<1024x128xf32, #tpu.memory_space<any>>, %arg5: memref<1024x128xf32, #tpu.memory_space<any>>, %arg6: memref<1x1xf32, #tpu.memory_space<vmem>>, %arg7: memref<128x128xf32, #tpu.memory_space<vmem>>, %arg8: memref<2x32x128xf32, #tpu.memory_space<vmem>>, %arg9: memref<32x1xf32, #tpu.memory_space<vmem>>, %arg10: memref<32x1xf32, #tpu.memory_space<vmem>>, %arg11: memref<1x1xf32, #tpu.memory_space<vmem>>, %arg12: memref<3x!tpu.dma_semaphore, #tpu.memory_space<semaphore_mem>>) attributes {dimension_semantics = [#tpu.dimension_semantics<arbitrary>, #tpu.dimension_semantics<arbitrary>], iteration_bounds = array<i64: 4, 4>, scalar_prefetch = 2 : i64, scratch_operands = 6 : i64, tpu.core_type = #tpu.core_type<tc>, window_params = [{}, {}, {pipeline_mode = #tpu.pipeline_mode<synchronous>, transform_indices = @transform_2, window_bounds = array<i64: 1, 1>}]} {
    %c2_i32 = arith.constant 2 : i32
    %c0_i32 = arith.constant 0 : i32
    %0 = arith.cmpi eq, %c2_i32, %c0_i32 : i32
    %c1_i32 = arith.constant 1 : i32
    %1 = arith.select %0, %c1_i32, %c2_i32 : i32
    %2 = arith.remsi %arg0, %1 : i32
    %c0_i32_0 = arith.constant 0 : i32
    %3 = arith.cmpi ne, %2, %c0_i32_0 : i32
    %c0_i32_1 = arith.constant 0 : i32
    %4 = arith.cmpi slt, %2, %c0_i32_1 : i32
    %c0_i32_2 = arith.constant 0 : i32
    %5 = arith.cmpi slt, %1, %c0_i32_2 : i32
    %6 = arith.xori %4, %5 : i1
    %7 = arith.andi %6, %3 : i1
    %8 = arith.addi %2, %1 : i32
    %9 = arith.select %7, %8, %2 : i32
    %c0_i32_3 = arith.constant 0 : i32
    %10 = arith.cmpi eq, %arg0, %c0_i32_3 : i32
    %c0_i32_4 = arith.constant 0 : i32
    %11 = arith.cmpi eq, %arg1, %c0_i32_4 : i32
    %12 = arith.andi %10, %11 : i1
    %13 = arith.extui %12 : i1 to i32
    %c0_i32_5 = arith.constant 0 : i32
    %14 = arith.cmpi ne, %13, %c0_i32_5 : i32
    scf.if %14 {
      %cst_27 = arith.constant 0.000000e+00 : f32
      %55 = vector.broadcast %cst_27 : f32 to vector<1x1xf32>
      %c0_28 = arith.constant 0 : index
      %c0_29 = arith.constant 0 : index
      %56 = vector.load %arg11[%c0_28, %c0_29] : memref<1x1xf32, #tpu.memory_space<vmem>>, vector<1x1xf32>
      tpu.vector_store %arg11[%c0_28, %c0_29], %55 {strides = array<i32>} : memref<1x1xf32, #tpu.memory_space<vmem>>, vector<1x1xf32>,
      %c0_i32_30 = arith.constant 0 : i32
      %c128_i32 = arith.constant 128 : i32
      %57 = arith.addi %c0_i32_30, %c128_i32 : i32
      %c1_i32_31 = arith.constant 1 : i32
      scf.for %arg13 = %c0_i32_30 to %57 step %c1_i32_31  : i32 {
        %c1_i32_40 = arith.constant 1 : i32
        %62 = arith.muli %arg13, %c1_i32_40 : i32
        %c0_i32_41 = arith.constant 0 : i32
        %63 = arith.addi %c0_i32_41, %62 : i32
        %64 = arith.index_cast %63 : i32 to index
        %65 = memref.load %arg2[%64] : memref<128xi32, #tpu.memory_space<smem>>
        %c2_i32_42 = arith.constant 2 : i32
        %c0_i32_43 = arith.constant 0 : i32
        %66 = tpu.memref_slice %arg4[%65, %c0_i32_43] : memref<1024x128xf32, #tpu.memory_space<any>> -> memref<1x128xf32, #tpu.memory_space<any>>
        %c0_i32_44 = arith.constant 0 : i32
        %67 = tpu.memref_slice %arg7[%63, %c0_i32_44] : memref<128x128xf32, #tpu.memory_space<vmem>> -> memref<1x128xf32, #tpu.memory_space<vmem>>
        %68 = tpu.memref_slice %arg12[%c2_i32_42] : memref<3x!tpu.dma_semaphore, #tpu.memory_space<semaphore_mem>> -> memref<1x!tpu.dma_semaphore, #tpu.memory_space<semaphore_mem>>
        %69 = tpu.memref_squeeze %68 : memref<1x!tpu.dma_semaphore, #tpu.memory_space<semaphore_mem>> -> memref<!tpu.dma_semaphore, #tpu.memory_space<semaphore_mem>>
        tpu.enqueue_dma source(%66 : memref<1x128xf32, #tpu.memory_space<any>>) target(%67 : memref<1x128xf32, #tpu.memory_space<vmem>>) target_semaphore(%69 : memref<!tpu.dma_semaphore, #tpu.memory_space<semaphore_mem>>)
      }
      %c128_i32_32 = arith.constant 128 : i32
      %c0_i32_33 = arith.constant 0 : i32
      %c32_i32_34 = arith.constant 32 : i32
      %58 = arith.addi %c0_i32_33, %c32_i32_34 : i32
      %c1_i32_35 = arith.constant 1 : i32
      scf.for %arg13 = %c0_i32_33 to %58 step %c1_i32_35  : i32 {
        %c1_i32_40 = arith.constant 1 : i32
        %62 = arith.muli %arg13, %c1_i32_40 : i32
        %c0_i32_41 = arith.constant 0 : i32
        %63 = arith.addi %c0_i32_41, %62 : i32
        %c0_i32_42 = arith.constant 0 : i32
        %64 = arith.addi %c0_i32_42, %63 : i32
        %65 = arith.index_cast %64 : i32 to index
        %66 = memref.load %arg3[%65] : memref<128xi32, #tpu.memory_space<smem>>
        %c0_i32_43 = arith.constant 0 : i32
        %c0_i32_44 = arith.constant 0 : i32
        %c0_i32_45 = arith.constant 0 : i32
        %67 = tpu.memref_slice %arg5[%66, %c0_i32_45] : memref<1024x128xf32, #tpu.memory_space<any>> -> memref<1x128xf32, #tpu.memory_space<any>>
        %c0_i32_46 = arith.constant 0 : i32
        %68 = tpu.memref_slice %arg8[%c0_i32_43, %63, %c0_i32_46] : memref<2x32x128xf32, #tpu.memory_space<vmem>> -> memref<1x1x128xf32, #tpu.memory_space<vmem>>
        %69 = tpu.memref_squeeze %68 : memref<1x1x128xf32, #tpu.memory_space<vmem>> -> memref<1x128xf32, #tpu.memory_space<vmem>>
        %70 = tpu.memref_slice %arg12[%c0_i32_44] : memref<3x!tpu.dma_semaphore, #tpu.memory_space<semaphore_mem>> -> memref<1x!tpu.dma_semaphore, #tpu.memory_space<semaphore_mem>>
        %71 = tpu.memref_squeeze %70 : memref<1x!tpu.dma_semaphore, #tpu.memory_space<semaphore_mem>> -> memref<!tpu.dma_semaphore, #tpu.memory_space<semaphore_mem>>
        tpu.enqueue_dma source(%67 : memref<1x128xf32, #tpu.memory_space<any>>) target(%69 : memref<1x128xf32, #tpu.memory_space<vmem>>) target_semaphore(%71 : memref<!tpu.dma_semaphore, #tpu.memory_space<semaphore_mem>>)
      }
      %c32_i32_36 = arith.constant 32 : i32
      %c2_i32_37 = arith.constant 2 : i32
      %c0_i32_38 = arith.constant 0 : i32
      %c0_i32_39 = arith.constant 0 : i32
      %59 = tpu.memref_slice %arg4[%c0_i32_38, %c0_i32_39] : memref<1024x128xf32, #tpu.memory_space<any>> -> memref<128x128xf32, #tpu.memory_space<any>>
      %60 = tpu.memref_slice %arg12[%c2_i32_37] : memref<3x!tpu.dma_semaphore, #tpu.memory_space<semaphore_mem>> -> memref<1x!tpu.dma_semaphore, #tpu.memory_space<semaphore_mem>>
      %61 = tpu.memref_squeeze %60 : memref<1x!tpu.dma_semaphore, #tpu.memory_space<semaphore_mem>> -> memref<!tpu.dma_semaphore, #tpu.memory_space<semaphore_mem>>
      tpu.wait_dma2 semaphore(%61 : memref<!tpu.dma_semaphore, #tpu.memory_space<semaphore_mem>>) src(%59 : memref<128x128xf32, #tpu.memory_space<any>>) dst(%arg7 : memref<128x128xf32, #tpu.memory_space<vmem>>)
    } else {
    }
    %c0_i32_6 = arith.constant 0 : i32
    %15 = arith.cmpi eq, %arg1, %c0_i32_6 : i32
    %16 = arith.extui %15 : i1 to i32
    %c0_i32_7 = arith.constant 0 : i32
    %17 = arith.cmpi ne, %16, %c0_i32_7 : i32
    scf.if %17 {
      %cst_27 = arith.constant 0xFF800000 : f32
      %55 = vector.broadcast %cst_27 : f32 to vector<32x1xf32>
      %c0_28 = arith.constant 0 : index
      %c0_29 = arith.constant 0 : index
      %56 = vector.load %arg9[%c0_28, %c0_29] : memref<32x1xf32, #tpu.memory_space<vmem>>, vector<32x1xf32>
      tpu.vector_store %arg9[%c0_28, %c0_29], %55 {strides = array<i32>} : memref<32x1xf32, #tpu.memory_space<vmem>>, vector<32x1xf32>,
      %cst_30 = arith.constant 0.000000e+00 : f32
      %57 = vector.broadcast %cst_30 : f32 to vector<32x1xf32>
      %c0_31 = arith.constant 0 : index
      %c0_32 = arith.constant 0 : index
      %58 = vector.load %arg10[%c0_31, %c0_32] : memref<32x1xf32, #tpu.memory_space<vmem>>, vector<32x1xf32>
      tpu.vector_store %arg10[%c0_31, %c0_32], %57 {strides = array<i32>} : memref<32x1xf32, #tpu.memory_space<vmem>>, vector<32x1xf32>,
      %c0_i32_33 = arith.constant 0 : i32
      %c0_i32_34 = arith.constant 0 : i32
      %59 = tpu.memref_slice %arg5[%c0_i32_33, %c0_i32_34] : memref<1024x128xf32, #tpu.memory_space<any>> -> memref<32x128xf32, #tpu.memory_space<any>>
      %c0_i32_35 = arith.constant 0 : i32
      %c0_i32_36 = arith.constant 0 : i32
      %60 = tpu.memref_slice %arg8[%9, %c0_i32_35, %c0_i32_36] : memref<2x32x128xf32, #tpu.memory_space<vmem>> -> memref<1x32x128xf32, #tpu.memory_space<vmem>>
      %61 = tpu.memref_squeeze %60 : memref<1x32x128xf32, #tpu.memory_space<vmem>> -> memref<32x128xf32, #tpu.memory_space<vmem>>
      %62 = tpu.memref_slice %arg12[%9] : memref<3x!tpu.dma_semaphore, #tpu.memory_space<semaphore_mem>> -> memref<1x!tpu.dma_semaphore, #tpu.memory_space<semaphore_mem>>
      %63 = tpu.memref_squeeze %62 : memref<1x!tpu.dma_semaphore, #tpu.memory_space<semaphore_mem>> -> memref<!tpu.dma_semaphore, #tpu.memory_space<semaphore_mem>>
      tpu.wait_dma2 semaphore(%63 : memref<!tpu.dma_semaphore, #tpu.memory_space<semaphore_mem>>) src(%59 : memref<32x128xf32, #tpu.memory_space<any>>) dst(%61 : memref<32x128xf32, #tpu.memory_space<vmem>>)
      %c1_i32_37 = arith.constant 1 : i32
      %64 = arith.addi %arg0, %c1_i32_37 : i32
      %c4_i32 = arith.constant 4 : i32
      %65 = arith.cmpi slt, %64, %c4_i32 : i32
      %66 = arith.extui %65 : i1 to i32
      %c0_i32_38 = arith.constant 0 : i32
      %67 = arith.cmpi ne, %66, %c0_i32_38 : i32
      scf.if %67 {
        %c1_i32_39 = arith.constant 1 : i32
        %68 = arith.addi %arg0, %c1_i32_39 : i32
        %c1_i32_40 = arith.constant 1 : i32
        %69 = arith.subi %c1_i32_40, %9 : i32
        %c32_i32_41 = arith.constant 32 : i32
        %70 = arith.muli %68, %c32_i32_41 : i32
        %c0_i32_42 = arith.constant 0 : i32
        %c32_i32_43 = arith.constant 32 : i32
        %71 = arith.addi %c0_i32_42, %c32_i32_43 : i32
        %c1_i32_44 = arith.constant 1 : i32
        scf.for %arg13 = %c0_i32_42 to %71 step %c1_i32_44  : i32 {
          %c1_i32_46 = arith.constant 1 : i32
          %72 = arith.muli %arg13, %c1_i32_46 : i32
          %c0_i32_47 = arith.constant 0 : i32
          %73 = arith.addi %c0_i32_47, %72 : i32
          %74 = arith.addi %70, %73 : i32
          %75 = arith.index_cast %74 : i32 to index
          %76 = memref.load %arg3[%75] : memref<128xi32, #tpu.memory_space<smem>>
          %c0_i32_48 = arith.constant 0 : i32
          %77 = tpu.memref_slice %arg5[%76, %c0_i32_48] : memref<1024x128xf32, #tpu.memory_space<any>> -> memref<1x128xf32, #tpu.memory_space<any>>
          %c0_i32_49 = arith.constant 0 : i32
          %78 = tpu.memref_slice %arg8[%69, %73, %c0_i32_49] : memref<2x32x128xf32, #tpu.memory_space<vmem>> -> memref<1x1x128xf32, #tpu.memory_space<vmem>>
          %79 = tpu.memref_squeeze %78 : memref<1x1x128xf32, #tpu.memory_space<vmem>> -> memref<1x128xf32, #tpu.memory_space<vmem>>
          %80 = tpu.memref_slice %arg12[%69] : memref<3x!tpu.dma_semaphore, #tpu.memory_space<semaphore_mem>> -> memref<1x!tpu.dma_semaphore, #tpu.memory_space<semaphore_mem>>
          %81 = tpu.memref_squeeze %80 : memref<1x!tpu.dma_semaphore, #tpu.memory_space<semaphore_mem>> -> memref<!tpu.dma_semaphore, #tpu.memory_space<semaphore_mem>>
          tpu.enqueue_dma source(%77 : memref<1x128xf32, #tpu.memory_space<any>>) target(%79 : memref<1x128xf32, #tpu.memory_space<vmem>>) target_semaphore(%81 : memref<!tpu.dma_semaphore, #tpu.memory_space<semaphore_mem>>)
        }
        %c32_i32_45 = arith.constant 32 : i32
      } else {
      }
    } else {
    }
    %c32_i32 = arith.constant 32 : i32
    %18 = arith.muli %arg1, %c32_i32 : i32
    %19 = tpu.assume_multiple %18, 32 : i32
    %20 = arith.index_cast %19 : i32 to index
    %c0 = arith.constant 0 : index
    %21 = vector.load %arg7[%20, %c0] : memref<128x128xf32, #tpu.memory_space<vmem>>, vector<32x128xf32>
    %22 = arith.index_cast %9 : i32 to index
    %c0_8 = arith.constant 0 : index
    %c0_9 = arith.constant 0 : index
    %23 = vector.load %arg8[%22, %c0_8, %c0_9] : memref<2x32x128xf32, #tpu.memory_space<vmem>>, vector<1x32x128xf32>
    %24 = vector.shape_cast %23 : vector<1x32x128xf32> to vector<32x128xf32>
    %25 = tpu.transpose %21, [1, 0] : vector<32x128xf32> -> vector<128x32xf32>
    %cst = arith.constant dense<0.000000e+00> : vector<32x32xf32>
    %26 = tpu.matmul %24, %25, %cst {dimension_numbers = #tpu.dot_dimension_numbers<[1], [0], [0], [1], [0, 0, 1, 1], [], []>} : vector<32x128xf32>, vector<128x32xf32>, vector<32x32xf32> -> vector<32x32xf32>
    %c0_10 = arith.constant 0 : index
    %c0_11 = arith.constant 0 : index
    %27 = vector.load %arg9[%c0_10, %c0_11] : memref<32x1xf32, #tpu.memory_space<vmem>>, vector<32x1xf32>
    %cst_12 = arith.constant dense<0xFF800000> : vector<32xf32>
    %28 = vector.multi_reduction <maximumf>, %26, %cst_12 [1] : vector<32x32xf32> to vector<32xf32>
    %29 = vector.shape_cast %28 : vector<32xf32> to vector<32x1xf32>
    %30 = arith.maximumf %27, %29 : vector<32x1xf32>
    %c0_13 = arith.constant 0 : index
    %c0_14 = arith.constant 0 : index
    %31 = vector.load %arg9[%c0_13, %c0_14] : memref<32x1xf32, #tpu.memory_space<vmem>>, vector<32x1xf32>
    %32 = arith.subf %31, %30 : vector<32x1xf32>
    %33 = math.exp %32 : vector<32x1xf32>
    %c0_15 = arith.constant 0 : index
    %c0_16 = arith.constant 0 : index
    %34 = vector.load %arg10[%c0_15, %c0_16] : memref<32x1xf32, #tpu.memory_space<vmem>>, vector<32x1xf32>
    %35 = arith.mulf %33, %34 : vector<32x1xf32>
    %36 = vector.broadcast %30 : vector<32x1xf32> to vector<32x32xf32>
    %37 = arith.subf %26, %36 : vector<32x32xf32>
    %38 = math.exp %37 : vector<32x32xf32>
    %cst_17 = arith.constant dense<0.000000e+00> : vector<32xf32>
    %39 = vector.multi_reduction <add>, %38, %cst_17 [1] : vector<32x32xf32> to vector<32xf32>
    %40 = vector.shape_cast %39 : vector<32xf32> to vector<32x1xf32>
    %41 = arith.addf %35, %40 : vector<32x1xf32>
    %c0_18 = arith.constant 0 : index
    %c0_19 = arith.constant 0 : index
    %42 = vector.load %arg10[%c0_18, %c0_19] : memref<32x1xf32, #tpu.memory_space<vmem>>, vector<32x1xf32>
    tpu.vector_store %arg10[%c0_18, %c0_19], %41 {strides = array<i32>} : memref<32x1xf32, #tpu.memory_space<vmem>>, vector<32x1xf32>,
    %c0_20 = arith.constant 0 : index
    %c0_21 = arith.constant 0 : index
    %43 = vector.load %arg9[%c0_20, %c0_21] : memref<32x1xf32, #tpu.memory_space<vmem>>, vector<32x1xf32>
    tpu.vector_store %arg9[%c0_20, %c0_21], %30 {strides = array<i32>} : memref<32x1xf32, #tpu.memory_space<vmem>>, vector<32x1xf32>,
    %44 = arith.cmpi eq, %arg1, %arg0 : i32
    %45 = arith.extui %44 : i1 to i32
    %c0_i32_22 = arith.constant 0 : i32
    %46 = arith.cmpi ne, %45, %c0_i32_22 : i32
    scf.if %46 {
      %55 = tpu.iota {dimensions = array<i32: 0>} : vector<32x32xi32>
      %56 = tpu.iota {dimensions = array<i32: 1>} : vector<32x32xi32>
      %57 = arith.cmpi eq, %55, %56 : vector<32x32xi32>
      %cst_27 = arith.constant 0.000000e+00 : f32
      %58 = vector.broadcast %cst_27 : f32 to vector<32x32xf32>
      %59 = arith.select %57, %26, %58 : vector<32x32xi1>, vector<32x32xf32>
      %cst_28 = arith.constant dense<0.000000e+00> : vector<32xf32>
      %60 = vector.multi_reduction <add>, %59, %cst_28 [1] : vector<32x32xf32> to vector<32xf32>
      %61 = vector.shape_cast %60 : vector<32xf32> to vector<32x1xf32>
      %c0_29 = arith.constant 0 : index
      %c0_30 = arith.constant 0 : index
      %62 = vector.load %arg11[%c0_29, %c0_30] : memref<1x1xf32, #tpu.memory_space<vmem>>, vector<1x1xf32>
      %cst_31 = arith.constant dense<0.000000e+00> : vector<1xf32>
      %63 = vector.multi_reduction <add>, %61, %cst_31 [0] : vector<32x1xf32> to vector<1xf32>
      %64 = vector.shape_cast %63 : vector<1xf32> to vector<1x1xf32>
      %65 = arith.subf %62, %64 : vector<1x1xf32>
      %c0_32 = arith.constant 0 : index
      %c0_33 = arith.constant 0 : index
      %66 = vector.load %arg11[%c0_32, %c0_33] : memref<1x1xf32, #tpu.memory_space<vmem>>, vector<1x1xf32>
      tpu.vector_store %arg11[%c0_32, %c0_33], %65 {strides = array<i32>} : memref<1x1xf32, #tpu.memory_space<vmem>>, vector<1x1xf32>,
    } else {
    }
    %c3_i32 = arith.constant 3 : i32
    %47 = arith.cmpi eq, %arg1, %c3_i32 : i32
    %48 = arith.extui %47 : i1 to i32
    %c0_i32_23 = arith.constant 0 : i32
    %49 = arith.cmpi ne, %48, %c0_i32_23 : i32
    scf.if %49 {
      %c0_27 = arith.constant 0 : index
      %c0_28 = arith.constant 0 : index
      %55 = vector.load %arg9[%c0_27, %c0_28] : memref<32x1xf32, #tpu.memory_space<vmem>>, vector<32x1xf32>
      %c0_29 = arith.constant 0 : index
      %c0_30 = arith.constant 0 : index
      %56 = vector.load %arg10[%c0_29, %c0_30] : memref<32x1xf32, #tpu.memory_space<vmem>>, vector<32x1xf32>
      %57 = math.log %56 : vector<32x1xf32>
      %58 = arith.addf %55, %57 : vector<32x1xf32>
      %c0_31 = arith.constant 0 : index
      %c0_32 = arith.constant 0 : index
      %59 = vector.load %arg11[%c0_31, %c0_32] : memref<1x1xf32, #tpu.memory_space<vmem>>, vector<1x1xf32>
      %cst_33 = arith.constant dense<0.000000e+00> : vector<1xf32>
      %60 = vector.multi_reduction <add>, %58, %cst_33 [0] : vector<32x1xf32> to vector<1xf32>
      %61 = vector.shape_cast %60 : vector<1xf32> to vector<1x1xf32>
      %62 = arith.addf %59, %61 : vector<1x1xf32>
      %c0_34 = arith.constant 0 : index
      %c0_35 = arith.constant 0 : index
      %63 = vector.load %arg11[%c0_34, %c0_35] : memref<1x1xf32, #tpu.memory_space<vmem>>, vector<1x1xf32>
      tpu.vector_store %arg11[%c0_34, %c0_35], %62 {strides = array<i32>} : memref<1x1xf32, #tpu.memory_space<vmem>>, vector<1x1xf32>,
    } else {
    }
    %c3_i32_24 = arith.constant 3 : i32
    %50 = arith.cmpi eq, %arg0, %c3_i32_24 : i32
    %c3_i32_25 = arith.constant 3 : i32
    %51 = arith.cmpi eq, %arg1, %c3_i32_25 : i32
    %52 = arith.andi %50, %51 : i1
    %53 = arith.extui %52 : i1 to i32
    %c0_i32_26 = arith.constant 0 : i32
    %54 = arith.cmpi ne, %53, %c0_i32_26 : i32
    scf.if %54 {
      %c0_27 = arith.constant 0 : index
      %c0_28 = arith.constant 0 : index
      %55 = vector.load %arg11[%c0_27, %c0_28] : memref<1x1xf32, #tpu.memory_space<vmem>>, vector<1x1xf32>
      %cst_29 = arith.constant 1.280000e+02 : f32
      %56 = vector.broadcast %cst_29 : f32 to vector<1x1xf32>
      %57 = arith.divf %55, %56 : vector<1x1xf32>
      %c0_30 = arith.constant 0 : index
      %c0_31 = arith.constant 0 : index
      %58 = vector.load %arg6[%c0_30, %c0_31] : memref<1x1xf32, #tpu.memory_space<vmem>>, vector<1x1xf32>
      tpu.vector_store %arg6[%c0_30, %c0_31], %57 {strides = array<i32>} : memref<1x1xf32, #tpu.memory_space<vmem>>, vector<1x1xf32>,
    } else {
    }
    return
  }
  func.func @transform_2(%arg0: i32, %arg1: i32, %arg2: memref<128xi32, #tpu.memory_space<smem>>, %arg3: memref<128xi32, #tpu.memory_space<smem>>) -> (i32, i32) {
    %c0_i32 = arith.constant 0 : i32
    %c0_i32_0 = arith.constant 0 : i32
    %c0_i32_1 = arith.constant 0 : i32
    return %c0_i32, %c0_i32_0 : i32, i32
  }
}

</mosaic_0001>

<llo_original>
// kernel: tpu_custom_call.1
$region0: #{tpu_custom_call.1}
  #allocation0 [shape = 'u32[]', space=smem, size = 0x4, offset = 0x4, fixed_abs, tag = 'smem constant byte address 0x4 - core index']
  #allocation1 [shape = 'u32[144,128]{1,0:T(1,128)}', space=vmem, size = 0x12000, scoped, tag = 'internal scratch']
  #allocation2 [shape = 'f32[128,128]{1,0:T(8,128)}', space=vmem, size = 0x10000, scoped, tag = 'scratch operand']
  #allocation3 [shape = 'f32[2,32,128]{2,1,0:T(8,128)}', space=vmem, size = 0x8000, scoped, tag = 'scratch operand']
  #allocation4 [shape = 'f32[32,1]{1,0:T(8,128)}', space=vmem, size = 0x4000, scoped, tag = 'scratch operand']
  #allocation5 [shape = 'f32[32,1]{1,0:T(8,128)}', space=vmem, size = 0x4000, scoped, tag = 'scratch operand']
  #allocation6 [shape = 'f32[1,1]{1,0:T(1,128)}', space=vmem, size = 0x200, scoped, tag = 'scratch operand']
  #allocation7 [shape = 's32[3]{0}', space=sflag, size = 0xc, scoped, tag = 'scratch operand']
  #allocation8 [shape = 's32[1]{0}', space=sflag, size = 0x4, scoped, tag = 'scoped memory for tpu_custom_call.1']
  #allocation9 [shape = 'u8[512]{0}', space=smem, size = 0x200, scoped, tag = 'prefetched SMEM operand 0']
  #allocation10 [shape = 'u8[512]{0}', space=smem, size = 0x200, scoped, tag = 'prefetched SMEM operand 1']
  #allocation13 [shape = 's32[]', space=sflag, size = 0x4, offset = 0, fixed_abs, tag = 'sflag constant byte address 0x0 - dummy sync flag']
  #allocation14 [shape = 's32[]', space=sflag, size = 0x4, offset = 0, fixed_abs, tag = 'sflag constant byte address 0x0 - dummy sync flag']
  #allocation15 [shape = 'u32[]', space=smem, size = 0x4, offset = 0x44, fixed_abs, tag = 'smem constant byte address 0x44 - assertion arg 0']
  #allocation16 [shape = 'u32[]', space=smem, size = 0x4, offset = 0x48, fixed_abs, tag = 'smem constant byte address 0x48 - assertion arg 1']
  #allocation17 [shape = 's32[]', space=sflag, size = 0x4, offset = 0, fixed_abs, tag = 'sflag constant byte address 0x0 - dummy sync flag']
  #allocation18 [shape = 's32[]', space=sflag, size = 0x4, offset = 0, fixed_abs, tag = 'sflag constant byte address 0x0 - dummy sync flag']
  #allocation19 [shape = 's32[]', space=sflag, size = 0x4, offset = 0, fixed_abs, tag = 'sflag constant byte address 0x0 - dummy sync flag']
  #allocation20 [shape = 's32[]', space=sflag, size = 0x4, offset = 0, fixed_abs, tag = 'sflag constant byte address 0x0 - dummy sync flag']
  %s0 = inlined_call_operand.hbm [shape: s32[128], index: 0, kind: input, shape index: {}]
  %s1 = inlined_call_operand.vmem [shape: s32[128], index: 1, kind: input, shape index: {}]
  %s2 = inlined_call_operand.hbm [shape: f32[1024,128], index: 2, kind: input, shape index: {}]
  %s3 = inlined_call_operand.hbm [shape: f32[1024,128], index: 3, kind: input, shape index: {}]
  %s4 = inlined_call_operand.hbm [shape: f32[1,1], index: 4, kind: output, shape index: {}]
  %s5 = sld [smem:[#allocation0]]
  $region82: #{tpu_custom_call.1} parent=0
    _
  %s7 = ssub.s32 1, %s5
  %s8 = scalar_select 0, %s7, %s5
  %10 = dma.hbm_to_smem %s0, 16, [#allocation9], [#allocation8]
  %s11 = sshll.u32 %s1, 4
  %s12 = int_to_ptr.vmem [resolvable:$true] %s11
  %14 = dma.vmem_to_smem %s12, 16, [#allocation10], [#allocation8]
  %15 = dma.done [#allocation8], 32
  %16 = sfence
  $region1: #{tpu_custom_call.1} parent=0
    #allocation11 [shape = 'u8[512]{0}', space=vmem, size = 0x400, scoped, tag = 'output window, operand 0, single buffered']
    #allocation12 [shape = 's32[2]{0}', space=sflag, size = 0x8, scoped, tag = 'scoped memory for tpu_custom_call.1']
    %17 = vsyncpa [#allocation12], 0
    loop: start=0, step=1, limit=17
    $region2: #{tpu_custom_call.1} parent=1 // loop_pre_header
      _
    $region3: #{tpu_custom_call.1} parent=1 // loop_header
      %s19 = sphi 0, %s23
      %p20 = scmp.ge.s32.totalorder %s19, 17
      %s25 = sphi 0, %s35
      %s26 = sphi 0, %s31
      %s27 = sphi 0, %s25
      %s28 = sphi 0, %s26
      %s36 = sphi 0, %s36
      %s38 = sphi 0, %s36
      %s46 = sphi 0, %s38
    $region4: #{tpu_custom_call.1} parent=1 // loop_header_branch
      %22 = sbr.rel (%p20) target = $region8
    $region5: #{tpu_custom_call.1} parent=1 // loop_body
      %s24 = ssub.s32 %s19, 1
      %s29 = sadd.s32 1, %s26
      %p30 = scmp.ge.s32.totalorder %s29, 4
      %s31 = scalar_select %p30, 0, %s29
      %s32 = sadd.s32 1, %s25
      %s33 = scalar_select %p30, %s32, %s25
      %p34 = scmp.ge.s32.totalorder %s33, 4
      %s35 = scalar_select %p34, 0, %s33
      %s37 = sadd.s32 %s36, 1
      %p39 = scmp.eq.s32.totalorder %s19, 15
      %p40 = scmp.ne.s32.totalorder %s36, %s38
      %p41 = scmp.eq.s32.totalorder %s19, 0
      %p42 = por %p40, %p41
      %p43 = scmp.ne.s32.totalorder %s36, %s38
      %p44 = scmp.eq.s32.totalorder %s24, 15
      %p45 = por %p43, %p44
      %p47 = scmp.ne.s32.totalorder %s38, %s46
      %p48 = scmp.eq.s32.totalorder %s24, 0
      %p49 = por %p47, %p48
      %p50 = scmp.lt.s32.totalorder %s19, 16
      // Predicated region
      $region9: #{tpu_custom_call.1} parent=5 // pred_check
        %p51 = pneg %p50
      $region10: #{tpu_custom_call.1} parent=5 // pred_check_branch
        %53 = sbr.rel (%p51) target = $region12
      $region11: #{tpu_custom_call.1} parent=5 // pred_region
        %p54 = pneg %p42
        %p55 = pneg %p39
        %p56 = scmp.lt.s32.totalorder %s25, 0
        %s57 = ssub.s32 0, %s25
        %s58 = scalar_select %p56, %s57, %s25
        %s59 = sand.u32 %s58, 1
        %s60 = ssub.s32 0, %s59
        %s61 = scalar_select %p56, %s60, %s59
        %p62 = scmp.ne.s32.totalorder %s61, 0
        %p63 = scmp.lt.s32.totalorder %s61, 0
        %p64 = pnand %p63, %p62
        %p65 = pneg %p64
        %s66 = sadd.s32 %s61, 2
        %s67 = scalar_select %p65, %s66, %s61
        %p68 = scmp.eq.s32.totalorder %s25, 0
        %p69 = scmp.eq.s32.totalorder %s26, 0
        %p70 = pnand %p68, %p69
        %p71 = pneg %p70
        // Predicated region
        $region13: #{tpu_custom_call.1} parent=11 // pred_check
          _
        $region14: #{tpu_custom_call.1} parent=11 // pred_check_branch
          %73 = sbr.rel (%p70) target = $region16
        $region15: #{tpu_custom_call.1} parent=11 // pred_region
          %vm74 = vcmask 0
          %75 = vst.msk [vmem:[#allocation6] sm:$0x1] %vm74, 0.0
          loop: start=0, step=1, limit=128
          $region17: #{tpu_custom_call.1} parent=15 // loop_pre_header
            _
          $region18: #{tpu_custom_call.1} parent=15 // loop_header
            %s77 = sphi 0, %s81
            %p78 = scmp.ge.s32.totalorder %s77, 128
          $region19: #{tpu_custom_call.1} parent=15 // loop_header_branch
            %80 = sbr.rel (%p78) target = $region23
          $region20: #{tpu_custom_call.1} parent=15 // loop_body
            %s82 = sld [smem:[#allocation9 + %s77]]
            %s83 = smul.addr %s82, 16
            %s84 = scalar_lea.hbm %s2, %s83
            %s85 = scalar_lea.vmem [#allocation2], %s77
            %s86 = scalar_lea.sflag [#allocation7], 2
            // Predicated region
            $region24: #{tpu_custom_call.1} parent=20 // pred_check
              _
            $region25: #{tpu_custom_call.1} parent=20 // pred_check_branch
              %88 = sbr.rel target = $region27
            $region26: #{tpu_custom_call.1} parent=20 // pred_region
              %89 = sst [smem:[#allocation15]] [#allocation14]
              %90 = sst [smem:[#allocation16]] [#allocation13]
            $region27: #{tpu_custom_call.1} parent=20 // pred_fallthru
              _
            %92 = shalt.err (0)
            %s94 = sshll.u32 %s85, 4
            %s95 = int_to_ptr.vmem [resolvable:$true] %s94
            %97 = dma.hbm_to_vmem [thread:$0]  %s84, 16, %s95, %s86
          $region21: #{tpu_custom_call.1} parent=15 // loop_footer
            %s81 = sadd.s32 1, %s77
          $region22: #{tpu_custom_call.1} parent=15 // loop_footer_branch
            %76 = sbr.rel target = $region18
          $region23: #{tpu_custom_call.1} parent=15 // loop_exit
            _
          loop: start=0, step=1, limit=32
          $region28: #{tpu_custom_call.1} parent=15 // loop_pre_header
            _
          $region29: #{tpu_custom_call.1} parent=15 // loop_header
            %s99 = sphi 0, %s103
            %p100 = scmp.ge.s32.totalorder %s99, 32
          $region30: #{tpu_custom_call.1} parent=15 // loop_header_branch
            %102 = sbr.rel (%p100) target = $region34
          $region31: #{tpu_custom_call.1} parent=15 // loop_body
            %s104 = sld [smem:[#allocation10 + %s99]]
            %s105 = smul.addr %s104, 16
            %s106 = scalar_lea.hbm %s3, %s105
            %s107 = scalar_lea.vmem [#allocation3], %s99
            // Predicated region
            $region35: #{tpu_custom_call.1} parent=31 // pred_check
              _
            $region36: #{tpu_custom_call.1} parent=31 // pred_check_branch
              %109 = sbr.rel target = $region38
            $region37: #{tpu_custom_call.1} parent=31 // pred_region
              %110 = sst [smem:[#allocation15]] [#allocation18]
              %111 = sst [smem:[#allocation16]] [#allocation17]
            $region38: #{tpu_custom_call.1} parent=31 // pred_fallthru
              _
            %113 = shalt.err (0)
            %s115 = sshll.u32 %s107, 4
            %s116 = int_to_ptr.vmem [resolvable:$true] %s115
            %118 = dma.hbm_to_vmem [thread:$0]  %s106, 16, %s116, [#allocation7]
          $region32: #{tpu_custom_call.1} parent=15 // loop_footer
            %s103 = sadd.s32 1, %s99
          $region33: #{tpu_custom_call.1} parent=15 // loop_footer_branch
            %98 = sbr.rel target = $region29
          $region34: #{tpu_custom_call.1} parent=15 // loop_exit
            _
          %s119 = scalar_lea.sflag [#allocation7], 2
          %s120 = smul.u32 128, 1
          %s121 = sshll.u32 %s120, 4
          %122 = dma.done %s119, %s121
        $region16: #{tpu_custom_call.1} parent=11 // pred_fallthru
          _
        // Predicated region
        $region39: #{tpu_custom_call.1} parent=11 // pred_check
          %p123 = pneg %p69
        $region40: #{tpu_custom_call.1} parent=11 // pred_check_branch
          %125 = sbr.rel (%p123) target = $region42
        $region41: #{tpu_custom_call.1} parent=11 // pred_region
          %vm126 = vcmask 7168
          %127 = vst.msk [vmem:[#allocation4] sm:$0xff] %vm126, -inf
          %128 = vst.msk [vmem:[#allocation4 + $0x8] sm:$0xff] %vm126, -inf
          %129 = vst.msk [vmem:[#allocation4 + $0x10] sm:$0xff] %vm126, -inf
          %130 = vst.msk [vmem:[#allocation4 + $0x18] sm:$0xff] %vm126, -inf
          %131 = vst.msk [vmem:[#allocation5] sm:$0xff] %vm126, 0.0
          %132 = vst.msk [vmem:[#allocation5 + $0x8] sm:$0xff] %vm126, 0.0
          %133 = vst.msk [vmem:[#allocation5 + $0x10] sm:$0xff] %vm126, 0.0
          %134 = vst.msk [vmem:[#allocation5 + $0x18] sm:$0xff] %vm126, 0.0
          %s135 = scalar_lea.sflag [#allocation7], %s67
          %s136 = smul.u32 32, 1
          %s137 = sshll.u32 %s136, 4
          %138 = dma.done %s135, %s137
          %s139 = sadd.s32 %s25, 1
          %p140 = scmp.lt.s32.totalorder %s139, 4
          // Predicated region
          $region43: #{tpu_custom_call.1} parent=41 // pred_check
            %p141 = pneg %p140
          $region44: #{tpu_custom_call.1} parent=41 // pred_check_branch
            %143 = sbr.rel (%p141) target = $region46
          $region45: #{tpu_custom_call.1} parent=41 // pred_region
            %s144 = ssub.s32 1, %s67
            %s145 = smul.u32 %s139, 32
            loop: start=0, step=1, limit=32
            $region47: #{tpu_custom_call.1} parent=45 // loop_pre_header
              _
            $region48: #{tpu_custom_call.1} parent=45 // loop_header
              %s147 = sphi 0, %s151
              %p148 = scmp.ge.s32.totalorder %s147, 32
            $region49: #{tpu_custom_call.1} parent=45 // loop_header_branch
              %150 = sbr.rel (%p148) target = $region53
            $region50: #{tpu_custom_call.1} parent=45 // loop_body
              %s152 = sadd.s32 %s145, %s147
              %s153 = sld [smem:[#allocation10 + %s152]]
              %s154 = smul.addr %s153, 16
              %s155 = scalar_lea.hbm %s3, %s154
              %s156 = smul.u32 %s144, 32
              %s157 = sadd.s32 %s147, %s156
              %s158 = scalar_lea.vmem [#allocation3], %s157
              %s159 = scalar_lea.sflag [#allocation7], %s144
              // Predicated region
              $region54: #{tpu_custom_call.1} parent=50 // pred_check
                _
              $region55: #{tpu_custom_call.1} parent=50 // pred_check_branch
                %161 = sbr.rel target = $region57
              $region56: #{tpu_custom_call.1} parent=50 // pred_region
                %162 = sst [smem:[#allocation15]] [#allocation20]
                %163 = sst [smem:[#allocation16]] [#allocation19]
              $region57: #{tpu_custom_call.1} parent=50 // pred_fallthru
                _
              %165 = shalt.err (0)
              %s167 = sshll.u32 %s158, 4
              %s168 = int_to_ptr.vmem [resolvable:$true] %s167
              %170 = dma.hbm_to_vmem [thread:$0]  %s155, 16, %s168, %s159
            $region51: #{tpu_custom_call.1} parent=45 // loop_footer
              %s151 = sadd.s32 1, %s147
            $region52: #{tpu_custom_call.1} parent=45 // loop_footer_branch
              %146 = sbr.rel target = $region48
            $region53: #{tpu_custom_call.1} parent=45 // loop_exit
              _
          $region46: #{tpu_custom_call.1} parent=41 // pred_fallthru
            _
        $region42: #{tpu_custom_call.1} parent=11 // pred_fallthru
          _
        %s171 = smul.u32 %s26, 32
        %s172 = scalar_lea.vmem [#allocation2], %s171
        %v173 = vld [vmem:[%s172] sm:$0xff]
        %v174 = vld [vmem:[%s172 + $0x8] sm:$0xff]
        %v175 = vld [vmem:[%s172 + $0x10] sm:$0xff]
        %v176 = vld [vmem:[%s172 + $0x18] sm:$0xff]
        %s177 = smul.u32 %s67, 32
        %s178 = scalar_lea.vmem [#allocation3], %s177
        %v179 = vld [vmem:[%s178] sm:$0xff]
        %v180 = vld [vmem:[%s178 + $0x8] sm:$0xff]
        %v181 = vld [vmem:[%s178 + $0x10] sm:$0xff]
        %v182 = vld [vmem:[%s178 + $0x18] sm:$0xff]
        %183 = vmatprep.subr.mxu0 0.0
        %184 = vmatpush1.xpose.msra.mxu0 0.0
        %185 = vmatprep.subr.mxu0 0.0
        %186 = vmatpush1.xpose.msra.mxu0 0.0
        %187 = vmatprep.subr.mxu0 0.0
        %188 = vmatpush1.xpose.msra.mxu0 0.0
        %189 = vmatprep.subr.mxu0 0.0
        %190 = vmatpush1.xpose.msra.mxu0 0.0
        %191 = vmatprep.subr.mxu0 0.0
        %192 = vmatpush1.xpose.msra.mxu0 0.0
        %193 = vmatprep.subr.mxu0 0.0
        %194 = vmatpush1.xpose.msra.mxu0 0.0
        %195 = vmatprep.subr.mxu0 0.0
        %196 = vmatpush1.xpose.msra.mxu0 0.0
        %197 = vmatprep.subr.mxu0 0.0
        %198 = vmatpush1.xpose.msra.mxu0 0.0
        %199 = vmatprep.subr.mxu0 0.0
        %200 = vmatpush1.xpose.msra.mxu0 0.0
        %201 = vmatprep.subr.mxu0 0.0
        %202 = vmatpush1.xpose.msra.mxu0 0.0
        %203 = vmatprep.subr.mxu0 0.0
        %204 = vmatpush1.xpose.msra.mxu0 0.0
        %205 = vmatprep.subr.mxu0 0.0
        %206 = vmatpush1.xpose.msra.mxu0 0.0
        %207 = vmatprep.subr.mxu0 0.0
        %208 = vmatpush1.xpose.msra.mxu0 %v176
        %209 = vmatprep.subr.mxu0 0.0
        %210 = vmatpush1.xpose.msra.mxu0 %v175
        %211 = vmatprep.subr.mxu0 0.0
        %212 = vmatpush1.xpose.msra.mxu0 %v174
        %213 = vmatprep.subr.mxu0 0.0
        %214 = vmatpush1.xpose.msra.mxu0 %v173
        %215 = vmatprep.subr.mxu0 0.0
        %216 = vmatpush2.xpose.msra.mxu0 0.0
        %217 = vmatprep.subr.mxu0 0.0
        %218 = vmatpush2.xpose.msra.mxu0 0.0
        %219 = vmatprep.subr.mxu0 0.0
        %220 = vmatpush2.xpose.msra.mxu0 0.0
        %221 = vmatprep.subr.mxu0 0.0
        %222 = vmatpush2.xpose.msra.mxu0 0.0
        %223 = vmatprep.subr.mxu0 0.0
        %224 = vmatpush2.xpose.msra.mxu0 0.0
        %225 = vmatprep.subr.mxu0 0.0
        %226 = vmatpush2.xpose.msra.mxu0 0.0
        %227 = vmatprep.subr.mxu0 0.0
        %228 = vmatpush2.xpose.msra.mxu0 0.0
        %229 = vmatprep.subr.mxu0 0.0
        %230 = vmatpush2.xpose.msra.mxu0 0.0
        %231 = vmatprep.subr.mxu0 0.0
        %232 = vmatpush2.xpose.msra.mxu0 0.0
        %233 = vmatprep.subr.mxu0 0.0
        %234 = vmatpush2.xpose.msra.mxu0 0.0
        %235 = vmatprep.subr.mxu0 0.0
        %236 = vmatpush2.xpose.msra.mxu0 0.0
        %237 = vmatprep.subr.mxu0 0.0
        %238 = vmatpush2.xpose.msra.mxu0 0.0
        %239 = vmatprep.subr.mxu0 0.0
        %240 = vmatpush2.xpose.msra.mxu0 0.0
        %241 = vmatprep.subr.mxu0 0.0
        %242 = vmatpush2.xpose.msra.mxu0 0.0
        %243 = vmatprep.subr.mxu0 0.0
        %244 = vmatpush2.xpose.msra.mxu0 0.0
        %245 = vmatprep.subr.mxu0 0.0
        %246 = vmatpush2.xpose.msra.mxu0 0.0
        %247 = vmatprep.mubr.f32.mxu0 0.0
        %248 = vmatmul.mubr.f32.gmra.mxu0 %v179
        %v249 = vpop.f32.mrf.mxu0
        %v250 = vadd.f32 0.0, %v249
        %v251 = vpop.f32.mrf.mxu0
        %252 = vmatprep.mubr.f32.mxu0 0.0
        %253 = vmatmul.mubr.f32.gmra.mxu0 %v180
        %v254 = vpop.f32.mrf.mxu0
        %v255 = vadd.f32 0.0, %v254
        %v256 = vpop.f32.mrf.mxu0
        %257 = vmatprep.mubr.f32.mxu0 0.0
        %258 = vmatmul.mubr.f32.gmra.mxu0 %v181
        %v259 = vpop.f32.mrf.mxu0
        %v260 = vadd.f32 0.0, %v259
        %v261 = vpop.f32.mrf.mxu0
        %262 = vmatprep.mubr.f32.mxu0 0.0
        %263 = vmatmul.mubr.f32.gmra.mxu0 %v182
        %v264 = vpop.f32.mrf.mxu0
        %v265 = vadd.f32 0.0, %v264
        %v266 = vpop.f32.mrf.mxu0
        %267 = vdwg.mxu0
        %v268 = vld [vmem:[#allocation4] sm:$0xff]
        %v269 = vld [vmem:[#allocation4 + $0x8] sm:$0xff]
        %v270 = vld [vmem:[#allocation4 + $0x10] sm:$0xff]
        %v271 = vld [vmem:[#allocation4 + $0x18] sm:$0xff]
        %vm272 = vcmask 261120
        %v273 = vsel %vm272, %v250, -inf
        %274 = vmax.xlane.f32.xlu0 %v273
        %v275 = vpop.xlane.xlu0 %274
        %v276 = vsel %vm272, %v255, -inf
        %277 = vmax.xlane.f32.xlu0 %v276
        %v278 = vpop.xlane.xlu0 %277
        %v279 = vsel %vm272, %v260, -inf
        %280 = vmax.xlane.f32.xlu0 %v279
        %v281 = vpop.xlane.xlu0 %280
        %v282 = vsel %vm272, %v265, -inf
        %283 = vmax.xlane.f32.xlu0 %v282
        %v284 = vpop.xlane.xlu0 %283
        %v285 = vmax.f32 %v268, %v275
        %v286 = vmax.f32 %v269, %v278
        %v287 = vmax.f32 %v270, %v281
        %v288 = vmax.f32 %v271, %v284
        %v289 = vsub.f32 %v268, %v285
        %v290 = vsub.f32 %v269, %v286
        %v291 = vsub.f32 %v270, %v287
        %v292 = vsub.f32 %v271, %v288
        %v293 = vmul.f32 %v289, 1.442695
        %v294 = vpow.pop %v293
        %v295 = vmul.f32 %v290, 1.442695
        %v296 = vpow.pop %v295
        %v297 = vmul.f32 %v291, 1.442695
        %v298 = vpow.pop %v297
        %v299 = vmul.f32 %v292, 1.442695
        %v300 = vpow.pop %v299
        %v301 = vld [vmem:[#allocation5] sm:$0xff]
        %v302 = vld [vmem:[#allocation5 + $0x8] sm:$0xff]
        %v303 = vld [vmem:[#allocation5 + $0x10] sm:$0xff]
        %v304 = vld [vmem:[#allocation5 + $0x18] sm:$0xff]
        %v305 = vmul.f32 %v294, %v301
        %v306 = vmul.f32 %v296, %v302
        %v307 = vmul.f32 %v298, %v303
        %v308 = vmul.f32 %v300, %v304
        %310 = vset.pattern.permute.xlu0 0
        %311 = vperm.xlu0 %310, %v285
        %v312 = vpop.permute.xlu0 %311
        %315 = vset.pattern.permute.xlu0 0
        %316 = vperm.xlu0 %315, %v286
        %v317 = vpop.permute.xlu0 %316
        %320 = vset.pattern.permute.xlu0 0
        %321 = vperm.xlu0 %320, %v287
        %v322 = vpop.permute.xlu0 %321
        %325 = vset.pattern.permute.xlu0 0
        %326 = vperm.xlu0 %325, %v288
        %v327 = vpop.permute.xlu0 %326
        %v329 = vsub.f32 %v250, %v312
        %v330 = vsub.f32 %v255, %v317
        %v331 = vsub.f32 %v260, %v322
        %v332 = vsub.f32 %v265, %v327
        %v333 = vmul.f32 %v329, 1.442695
        %v334 = vpow.pop %v333
        %v335 = vmul.f32 %v330, 1.442695
        %v336 = vpow.pop %v335
        %v337 = vmul.f32 %v331, 1.442695
        %v338 = vpow.pop %v337
        %v339 = vmul.f32 %v332, 1.442695
        %v340 = vpow.pop %v339
        %v341 = vsel %vm272, %v334, 0.0
        %342 = vadd.xlane.f32.xlu0 %v341
        %v343 = vpop.xlane.xlu0 %342
        %v344 = vsel %vm272, %v336, 0.0
        %345 = vadd.xlane.f32.xlu0 %v344
        %v346 = vpop.xlane.xlu0 %345
        %v347 = vsel %vm272, %v338, 0.0
        %348 = vadd.xlane.f32.xlu0 %v347
        %v349 = vpop.xlane.xlu0 %348
        %v350 = vsel %vm272, %v340, 0.0
        %351 = vadd.xlane.f32.xlu0 %v350
        %v352 = vpop.xlane.xlu0 %351
        %v353 = vadd.f32 %v305, %v343
        %v354 = vadd.f32 %v306, %v346
        %v355 = vadd.f32 %v307, %v349
        %v356 = vadd.f32 %v308, %v352
        %vm357 = vcmask 7168
        %358 = vst.msk [vmem:[#allocation5] sm:$0xff] %vm357, %v353
        %359 = vst.msk [vmem:[#allocation5 + $0x8] sm:$0xff] %vm357, %v354
        %360 = vst.msk [vmem:[#allocation5 + $0x10] sm:$0xff] %vm357, %v355
        %361 = vst.msk [vmem:[#allocation5 + $0x18] sm:$0xff] %vm357, %v356
        %362 = vst.msk [vmem:[#allocation4] sm:$0xff] %vm357, %v285
        %363 = vst.msk [vmem:[#allocation4 + $0x8] sm:$0xff] %vm357, %v286
        %364 = vst.msk [vmem:[#allocation4 + $0x10] sm:$0xff] %vm357, %v287
        %365 = vst.msk [vmem:[#allocation4 + $0x18] sm:$0xff] %vm357, %v288
        %p366 = scmp.eq.s32.totalorder %s26, %s25
        // Predicated region
        $region58: #{tpu_custom_call.1} parent=11 // pred_check
          %p367 = pneg %p366
        $region59: #{tpu_custom_call.1} parent=11 // pred_check_branch
          %369 = sbr.rel (%p367) target = $region61
        $region60: #{tpu_custom_call.1} parent=11 // pred_region
          %v370 = vlaneseq
          %v371 = vshrl.u32 %v370, 7
          %v372 = vadd.s32 %v371, 8
          %v373 = vadd.s32 %v371, 16
          %v374 = vadd.s32 %v371, 24
          %v375 = vlaneseq
          %v376 = vand.u32 %v375, 127
          %vm377 = vcmp.eq.s32.totalorder %v371, %v376
          %vm378 = vcmp.eq.s32.totalorder %v372, %v376
          %vm379 = vcmp.eq.s32.totalorder %v373, %v376
          %vm380 = vcmp.eq.s32.totalorder %v374, %v376
          %v381 = vsel %vm377, %v250, 0.0
          %v382 = vsel %vm378, %v255, 0.0
          %v383 = vsel %vm379, %v260, 0.0
          %v384 = vsel %vm380, %v265, 0.0
          %v385 = vsel %vm272, %v381, 0.0
          %386 = vadd.xlane.f32.xlu0 %v385
          %v387 = vpop.xlane.xlu0 %386
          %v388 = vsel %vm272, %v382, 0.0
          %389 = vadd.xlane.f32.xlu0 %v388
          %v390 = vpop.xlane.xlu0 %389
          %v391 = vsel %vm272, %v383, 0.0
          %392 = vadd.xlane.f32.xlu0 %v391
          %v393 = vpop.xlane.xlu0 %392
          %v394 = vsel %vm272, %v384, 0.0
          %395 = vadd.xlane.f32.xlu0 %v394
          %v396 = vpop.xlane.xlu0 %395
          %v397 = vld [vmem:[#allocation6] sm:$0x1]
          %v398 = vadd.f32 %v387, %v390
          %v399 = vadd.f32 %v398, %v393
          %v400 = vadd.f32 %v399, %v396
          %v401 = vrot.slane %v400, 4
          %v402 = vadd.f32 %v400, %v401
          %v403 = vrot.slane %v402, 2
          %v404 = vadd.f32 %v402, %v403
          %v405 = vrot.slane %v404, 1
          %v406 = vadd.f32 %v404, %v405
          %v407 = vsub.f32 %v397, %v406
          %vm408 = vcmask 0
          %409 = vst.msk [vmem:[#allocation6] sm:$0x1] %vm408, %v407
        $region61: #{tpu_custom_call.1} parent=11 // pred_fallthru
          _
        %p410 = scmp.eq.s32.totalorder %s26, 3
        // Predicated region
        $region62: #{tpu_custom_call.1} parent=11 // pred_check
          %p411 = pneg %p410
        $region63: #{tpu_custom_call.1} parent=11 // pred_check_branch
          %413 = sbr.rel (%p411) target = $region65
        $region64: #{tpu_custom_call.1} parent=11 // pred_region
          %v414 = vld [vmem:[#allocation4] sm:$0xff]
          %v415 = vld [vmem:[#allocation4 + $0x8] sm:$0xff]
          %v416 = vld [vmem:[#allocation4 + $0x10] sm:$0xff]
          %v417 = vld [vmem:[#allocation4 + $0x18] sm:$0xff]
          %v418 = vld [vmem:[#allocation5] sm:$0xff]
          %v419 = vld [vmem:[#allocation5 + $0x8] sm:$0xff]
          %v420 = vld [vmem:[#allocation5 + $0x10] sm:$0xff]
          %v421 = vld [vmem:[#allocation5 + $0x18] sm:$0xff]
          %v422 = vlog2.pop %v418
          %v423 = vmul.f32 %v422, 0.6931472
          %v424 = vlog2.pop %v419
          %v425 = vmul.f32 %v424, 0.6931472
          %v426 = vlog2.pop %v420
          %v427 = vmul.f32 %v426, 0.6931472
          %v428 = vlog2.pop %v421
          %v429 = vmul.f32 %v428, 0.6931472
          %v430 = vadd.f32 %v414, %v423
          %v431 = vadd.f32 %v415, %v425
          %v432 = vadd.f32 %v416, %v427
          %v433 = vadd.f32 %v417, %v429
          %v434 = vld [vmem:[#allocation6] sm:$0x1]
          %v435 = vsel %vm357, %v430, 0.0
          %v436 = vsel %vm357, %v431, 0.0
          %v437 = vadd.f32 %v435, %v436
          %v438 = vsel %vm357, %v432, 0.0
          %v439 = vadd.f32 %v437, %v438
          %v440 = vsel %vm357, %v433, 0.0
          %v441 = vadd.f32 %v439, %v440
          %v442 = vrot.slane %v441, 4
          %v443 = vadd.f32 %v441, %v442
          %v444 = vrot.slane %v443, 2
          %v445 = vadd.f32 %v443, %v444
          %v446 = vrot.slane %v445, 1
          %v447 = vadd.f32 %v445, %v446
          %v448 = vadd.f32 %v434, %v447
          %vm449 = vcmask 0
          %450 = vst.msk [vmem:[#allocation6] sm:$0x1] %vm449, %v448
        $region65: #{tpu_custom_call.1} parent=11 // pred_fallthru
          _
        %p451 = scmp.eq.s32.totalorder %s25, 3
        %p452 = pnand %p451, %p410
        %p453 = pneg %p452
        // Predicated region
        $region66: #{tpu_custom_call.1} parent=11 // pred_check
          _
        $region67: #{tpu_custom_call.1} parent=11 // pred_check_branch
          %455 = sbr.rel (%p452) target = $region69
        $region68: #{tpu_custom_call.1} parent=11 // pred_region
          %v456 = vld [vmem:[#allocation6] sm:$0x1]
          %v457 = vrcp.pop 128.0
          %v458 = vmul.f32 %v456, %v457
          %vm459 = vcmask 0
          %460 = vst.msk [vmem:[#allocation11] sm:$0x1] %vm459, %v458
        $region69: #{tpu_custom_call.1} parent=11 // pred_fallthru
          _
        // Predicated region
        $region70: #{tpu_custom_call.1} parent=11 // pred_check
          %p461 = pneg %p39
        $region71: #{tpu_custom_call.1} parent=11 // pred_check_branch
          %463 = sbr.rel (%p461) target = $region73
        $region72: #{tpu_custom_call.1} parent=11 // pred_region
          %s465 = ssub.s32 16, 16
          %466 = vsyncadd [#allocation12], %s465
          %s468 = sshll.u32 [#allocation11], 4
          %s469 = int_to_ptr.vmem [resolvable:$true] %s468
          %471 = dma.vmem_to_hbm [thread:$0]  %s469, 16, %s4, [#allocation12]
        $region73: #{tpu_custom_call.1} parent=11 // pred_fallthru
          _
        // Predicated region
        $region74: #{tpu_custom_call.1} parent=11 // pred_check
          %p472 = pneg %p39
        $region75: #{tpu_custom_call.1} parent=11 // pred_check_branch
          %474 = sbr.rel (%p472) target = $region77
        $region76: #{tpu_custom_call.1} parent=11 // pred_region
          %475 = dma.done [#allocation12], 16
        $region77: #{tpu_custom_call.1} parent=11 // pred_fallthru
          _
      $region12: #{tpu_custom_call.1} parent=5 // pred_fallthru
        _
      %p476 = scmp.le.s32.totalorder 1, %s19
      // Predicated region
      $region78: #{tpu_custom_call.1} parent=5 // pred_check
        %p477 = pneg %p476
      $region79: #{tpu_custom_call.1} parent=5 // pred_check_branch
        %479 = sbr.rel (%p477) target = $region81
      $region80: #{tpu_custom_call.1} parent=5 // pred_region
        %s480 = ssub.s32 %s19, 1
      $region81: #{tpu_custom_call.1} parent=5 // pred_fallthru
        _
    $region6: #{tpu_custom_call.1} parent=1 // loop_footer
      %s23 = sadd.s32 1, %s19
    $region7: #{tpu_custom_call.1} parent=1 // loop_footer_branch
      %18 = sbr.rel target = $region3
    $region8: #{tpu_custom_call.1} parent=1 // loop_exit
      _
    %481 = vsyncpa [#allocation12], 1
    %s482 = scalar_lea.sflag [#allocation12], 1
    %483 = vsyncpa %s482, 1
  %484 = vsyncmov [#allocation7]
  %s485 = vpop.sfrf %484
  %p486 = scmp.eq.s32.totalorder %s485, 0
  %p487 = pneg %p486
  %489 = shalt.err (%p487)
  %s490 = scalar_lea.sflag [#allocation7], 1
  %491 = vsyncmov %s490
  %s492 = vpop.sfrf %491
  %p493 = scmp.eq.s32.totalorder %s492, 0
  %p494 = pneg %p493
  %496 = shalt.err (%p494)
  %s497 = scalar_lea.sflag [#allocation7], 2
  %498 = vsyncmov %s497
  %s499 = vpop.sfrf %498
  %p500 = scmp.eq.s32.totalorder %s499, 0
  %p501 = pneg %p500
  %503 = shalt.err (%p501)

</llo_original>
